<compile_context>
chip_gen: v7x
topology: tpu7x:2x2x1
jax: 0.10.0
libtpu: 0.0.40
codegen_flags: <defaults>
</compile_context>

<pallas_src>
import functools

import jax
import jax.numpy as jnp
from jax import lax
from jax.experimental import pallas as pl
from jax.experimental.pallas import tpu as pltpu


_INV_SQRT2 = 0.7071067811865476


def _gelu_exact(h):
    # Matches torch.nn.GELU() default (erf formulation).
    return 0.5 * h * (1.0 + lax.erf(h * _INV_SQRT2))


# ---------------------------------------------------------------------------
# Small-M path: one fused block (Linear -> GELU -> BN(batch stats) -> Linear).
# ---------------------------------------------------------------------------
def _message_sender_small_kernel(x_ref, w1_ref, b1_ref, gamma_ref, beta_ref,
                                 w2_ref, b2_ref, out_ref, *, eps, m_rows):
    x = x_ref[...]
    if x.dtype != jnp.float32:          # conditional cast: no-op for f32 inputs
        x = x.astype(jnp.float32)

    h = jnp.dot(x, w1_ref[...], preferred_element_type=jnp.float32) + b1_ref[...]
    g = _gelu_exact(h)

    # One-pass batch statistics (biased variance, like BN training mode).
    inv_m = 1.0 / float(m_rows)
    s1 = jnp.sum(g, axis=0, keepdims=True)          # (1, n_e)
    s2 = jnp.sum(g * g, axis=0, keepdims=True)      # (1, n_e)
    mean = s1 * inv_m
    var = s2 * inv_m - mean * mean

    # Fold normalization + affine into a single per-channel scale/shift.
    scale = gamma_ref[...] * lax.rsqrt(var + eps)   # (1, n_e)
    shift = beta_ref[...] - mean * scale            # (1, n_e)
    norm = g * scale + shift

    out = jnp.dot(norm, w2_ref[...], preferred_element_type=jnp.float32) + b2_ref[...]
    out_ref[...] = out.astype(out_ref.dtype)


# ---------------------------------------------------------------------------
# Large-M path, phase 1: Linear + GELU, accumulate per-channel sum / sumsq.
# Grid is (n_par "parallel", tiles_per_par "arbitrary"); each parallel slice
# accumulates into its own stats slab (summed in phase 2).
# ---------------------------------------------------------------------------
def _phase1_kernel(x_ref, w1_ref, b1_ref, g_ref, stats_ref, *,
                   m_rows, tm, tiles_per_par, num_tiles, has_partial):
    x = x_ref[...]
    if x.dtype != jnp.float32:
        x = x.astype(jnp.float32)

    h = jnp.dot(x, w1_ref[...], preferred_element_type=jnp.float32) + b1_ref[...]
    g = _gelu_exact(h)
    g_ref[...] = g.astype(g_ref.dtype)   # bf16 writeback of the big intermediate

    @pl.when(pl.program_id(1) == 0)
    def _init():
        stats_ref[...] = jnp.zeros_like(stats_ref)

    def _accumulate(gv):
        s1 = jnp.sum(gv, axis=0, keepdims=True)         # (1, n_e)
        s2 = jnp.sum(gv * gv, axis=0, keepdims=True)    # (1, n_e)
        # Single stacked read-modify-write instead of two partial ones.
        stats_ref[...] += jnp.concatenate([s1, s2], axis=0)[None]

    if has_partial:
        tile_idx = pl.program_id(0) * tiles_per_par + pl.program_id(1)
        is_last = tile_idx == num_tiles - 1

        @pl.when(tile_idx < num_tiles - 1)
        def _full_tiles():
            _accumulate(g)

        @pl.when(is_last)
        def _partial_tile():
            # Only the last tile pays the iota/compare/select cost.
            rows = tile_idx * tm + lax.broadcasted_iota(jnp.int32, (tm, 1), 0)
            _accumulate(jnp.where(rows < m_rows, g, 0.0))
    else:
        _accumulate(g)


# ---------------------------------------------------------------------------
# Large-M path, phase 2: in-kernel BN fold from the stats + second Linear.
# Row tiles are independent -> "parallel" grid (both TCs on v7x).
# ---------------------------------------------------------------------------
def _phase2_kernel(g_ref, stats_ref, gamma_ref, beta_ref, w2_ref, b2_ref,
                   out_ref, *, inv_m, eps):
    stats = jnp.sum(stats_ref[...], axis=0)             # (2, n_e); n_par <= 2
    mean = stats[0:1, :] * inv_m                         # (1, n_e)
    var = stats[1:2, :] * inv_m - mean * mean
    scale = gamma_ref[...] * lax.rsqrt(var + eps)        # (1, n_e)
    shift = beta_ref[...] - mean * scale                 # (1, n_e)

    # bf16 -> f32 upcast of g + one madd/element; hidden under the MXU pushes.
    norm = g_ref[...].astype(jnp.float32) * scale + shift
    out = jnp.dot(norm, w2_ref[...], preferred_element_type=jnp.float32) + b2_ref[...]
    out_ref[...] = out.astype(out_ref.dtype)


def message_sender(h_t, w1, b1, gamma, beta, w2, b2, *, eps=1e-5,
                   block_rows=2048, g_dtype=jnp.bfloat16):
    """h_t: (S, B, n) -> (S, B, n_m).

    g_dtype: storage dtype of the GELU intermediate on the tiled path (bf16
    halves the dominant HBM stream; BN statistics and GELU math stay in f32).
    """
    S, B, n = h_t.shape
    n_e = w1.shape[1]
    n_m = w2.shape[1]
    M = S * B

    x = h_t.reshape(M, n)  # glue reshape in plain JAX (the Permutes are layout-only)

    # ------------------------------------------------------------------ tiny M
    if M <= block_rows:
        kernel = functools.partial(_message_sender_small_kernel, eps=eps, m_rows=M)
        out_flat = pl.pallas_call(
            kernel,
            out_shape=jax.ShapeDtypeStruct((M, n_m), h_t.dtype),
            grid=(1,),
            in_specs=[
                pl.BlockSpec((M, n), lambda i: (0, 0)),       # x
                pl.BlockSpec((n, n_e), lambda i: (0, 0)),     # w1
                pl.BlockSpec((1, n_e), lambda i: (0, 0)),     # b1
                pl.BlockSpec((1, n_e), lambda i: (0, 0)),     # gamma
                pl.BlockSpec((1, n_e), lambda i: (0, 0)),     # beta
                pl.BlockSpec((n_e, n_m), lambda i: (0, 0)),   # w2
                pl.BlockSpec((1, n_m), lambda i: (0, 0)),     # b2
            ],
            out_specs=pl.BlockSpec((M, n_m), lambda i: (0, 0)),
            compiler_params=pltpu.CompilerParams(
                dimension_semantics=("arbitrary",)),
        )(x, w1, b1, gamma, beta, w2, b2)
        return out_flat.reshape(S, B, n_m)

    # ----------------------------------------------------------------- large M
    # VMEM per grid step (double-buffered) at tm=2048 and these feature dims is
    # ~1.5 MiB, far inside every generation's scoped limit (v7x: 32 MiB default,
    # 64 MiB physical).  Re-budget / set vmem_limit_bytes only if n / n_e grow
    # into the hundreds together with a larger tm.
    tm = block_rows
    num_tiles = pl.cdiv(M, tm)
    # 2-way parallel split of phase 1 (uses both v7x TensorCores); on 1-TC
    # chips it just iterates serially.  Only when the tiles divide evenly.
    n_par = 2 if (num_tiles % 2 == 0) else 1
    tiles_per_par = num_tiles // n_par
    has_partial = (M % tm) != 0

    # Phase 1: per-tile Linear+GELU, write g (bf16), accumulate sum/sumsq per
    # parallel slice.
    p1 = functools.partial(_phase1_kernel, m_rows=M, tm=tm,
                           tiles_per_par=tiles_per_par, num_tiles=num_tiles,
                           has_partial=has_partial)
    g_flat, stats = pl.pallas_call(
        p1,
        out_shape=(jax.ShapeDtypeStruct((M, n_e), g_dtype),
                   jax.ShapeDtypeStruct((n_par, 2, n_e), jnp.float32)),
        grid=(n_par, tiles_per_par),
        in_specs=[
            pl.BlockSpec((tm, n), lambda c, i: (c * tiles_per_par + i, 0)),   # x
            pl.BlockSpec((n, n_e), lambda c, i: (0, 0)),                      # w1
            pl.BlockSpec((1, n_e), lambda c, i: (0, 0)),                      # b1
        ],
        out_specs=(
            pl.BlockSpec((tm, n_e), lambda c, i: (c * tiles_per_par + i, 0)), # g
            pl.BlockSpec((1, 2, n_e), lambda c, i: (c, 0, 0)),                # stats
        ),
        compiler_params=pltpu.CompilerParams(
            dimension_semantics=("parallel", "arbitrary")),
    )(x, w1, b1)

    # Phase 2: BN fold computed in-kernel from the raw stats + second Linear.
    p2 = functools.partial(_phase2_kernel, inv_m=1.0 / float(M), eps=eps)
    out_flat = pl.pallas_call(
        p2,
        out_shape=jax.ShapeDtypeStruct((M, n_m), h_t.dtype),
        grid=(num_tiles,),
        in_specs=[
            pl.BlockSpec((tm, n_e), lambda i: (i, 0)),            # g tile (bf16)
            pl.BlockSpec((n_par, 2, n_e), lambda i: (0, 0, 0)),   # partial stats
            pl.BlockSpec((1, n_e), lambda i: (0, 0)),             # gamma
            pl.BlockSpec((1, n_e), lambda i: (0, 0)),             # beta
            pl.BlockSpec((n_e, n_m), lambda i: (0, 0)),           # w2
            pl.BlockSpec((1, n_m), lambda i: (0, 0)),             # b2
        ],
        out_specs=pl.BlockSpec((tm, n_m), lambda i: (i, 0)),
        compiler_params=pltpu.CompilerParams(
            dimension_semantics=("parallel",)),                   # both TCs on v7x
    )(g_flat, stats, gamma, beta, w2, b2)

    return out_flat.reshape(S, B, n_m)


if __name__ == "__main__":
    def ref_forward(h_t, w1, b1, gamma, beta, w2, b2, eps=1e-5):
        S, B, _ = h_t.shape
        n_e = w1.shape[1]
        h = h_t @ w1 + b1[0]
        g = 0.5 * h * (1.0 + lax.erf(h * _INV_SQRT2))
        gf = g.reshape(S * B, n_e)
        mean = gf.mean(axis=0)
        var = ((gf - mean) ** 2).mean(axis=0)
        norm = (gf - mean) / jnp.sqrt(var + eps) * gamma[0] + beta[0]
        return norm.reshape(S, B, n_e) @ w2 + b2[0]

    def make_params(key, n, n_e, n_m):
        k_w1, k_b1, k_w2, k_b2 = jax.random.split(key, 4)
        w1 = jax.random.normal(k_w1, (n, n_e), jnp.float32) / jnp.sqrt(jnp.float32(n))
        b1 = 0.01 * jax.random.normal(k_b1, (1, n_e), jnp.float32)
        gamma = jnp.ones((1, n_e), jnp.float32)   # BatchNorm1d weight init
        beta = jnp.zeros((1, n_e), jnp.float32)   # BatchNorm1d bias init
        w2 = jax.random.normal(k_w2, (n_e, n_m), jnp.float32) / jnp.sqrt(jnp.float32(n_e))
        b2 = 0.01 * jax.random.normal(k_b2, (1, n_m), jnp.float32)
        return w1, b1, gamma, beta, w2, b2

    n, n_e, n_m = 32, 64, 16
    key = jax.random.PRNGKey(0)
    k_p, k_x1, k_x2, k_x3 = jax.random.split(key, 4)
    params = make_params(k_p, n, n_e, n_m)

    # 1) Module's natural tiny shapes -> single fused block path (all f32).
    S1, B1 = 8, 2
    h1 = jax.random.normal(k_x1, (S1, B1, n), jnp.float32)
    out1 = message_sender(h1, *params)
    jax.block_until_ready(out1)
    assert out1.shape == (S1, B1, n_m), out1.shape
    assert out1.dtype == jnp.float32
    ref1 = ref_forward(h1, *params)
    assert jnp.allclose(out1, ref1, atol=5e-5, rtol=5e-5), \
        float(jnp.max(jnp.abs(out1 - ref1)))

    # 2) Large M, even tile count -> 2048-row tiles, 2-way parallel phase 1,
    #    bf16 g intermediate (tolerance widened accordingly).
    S2, B2 = 512, 16                      # M = 8192 -> 4 row tiles of 2048
    h2 = jax.random.normal(k_x2, (S2, B2, n), jnp.float32)
    out2 = message_sender(h2, *params)
    jax.block_until_ready(out2)
    assert out2.shape == (S2, B2, n_m), out2.shape
    ref2 = ref_forward(h2, *params)
    assert jnp.allclose(out2, ref2, atol=3e-2, rtol=3e-2), \
        float(jnp.max(jnp.abs(out2 - ref2)))

    # 3) Odd tile count with a partial (masked) last tile -> sequential sweep.
    S3, B3 = 288, 16                      # M = 4608 -> 2 full tiles + 512 rows
    h3 = jax.random.normal(k_x3, (S3, B3, n), jnp.float32)
    out3 = message_sender(h3, *params)
    jax.block_until_ready(out3)
    assert out3.shape == (S3, B3, n_m), out3.shape
    ref3 = ref_forward(h3, *params)
    assert jnp.allclose(out3, ref3, atol=3e-2, rtol=3e-2), \
        float(jnp.max(jnp.abs(out3 - ref3)))

    print("KERNEL_OK")
</pallas_src>

<mosaic_0001>
module attributes {stable_mosaic.version = 11 : i64} {
  func.func @_message_sender_small_kernel(%arg0: i32, %arg1: memref<16x32xf32, #tpu.memory_space<vmem>>, %arg2: memref<32x64xf32, #tpu.memory_space<vmem>>, %arg3: memref<1x64xf32, #tpu.memory_space<vmem>>, %arg4: memref<1x64xf32, #tpu.memory_space<vmem>>, %arg5: memref<1x64xf32, #tpu.memory_space<vmem>>, %arg6: memref<64x16xf32, #tpu.memory_space<vmem>>, %arg7: memref<1x16xf32, #tpu.memory_space<vmem>>, %arg8: memref<16x16xf32, #tpu.memory_space<vmem>>) attributes {dimension_semantics = [#tpu.dimension_semantics<arbitrary>], iteration_bounds = array<i64: 1>, scalar_prefetch = 0 : i64, scratch_operands = 0 : i64, tpu.core_type = #tpu.core_type<tc>, window_params = [{pipeline_mode = #tpu.pipeline_mode<synchronous>, transform_indices = @transform_0, window_bounds = array<i64: 16, 32>}, {pipeline_mode = #tpu.pipeline_mode<synchronous>, transform_indices = @transform_1, window_bounds = array<i64: 32, 64>}, {pipeline_mode = #tpu.pipeline_mode<synchronous>, transform_indices = @transform_2, window_bounds = array<i64: 1, 64>}, {pipeline_mode = #tpu.pipeline_mode<synchronous>, transform_indices = @transform_3, window_bounds = array<i64: 1, 64>}, {pipeline_mode = #tpu.pipeline_mode<synchronous>, transform_indices = @transform_4, window_bounds = array<i64: 1, 64>}, {pipeline_mode = #tpu.pipeline_mode<synchronous>, transform_indices = @transform_5, window_bounds = array<i64: 64, 16>}, {pipeline_mode = #tpu.pipeline_mode<synchronous>, transform_indices = @transform_6, window_bounds = array<i64: 1, 16>}, {pipeline_mode = #tpu.pipeline_mode<synchronous>, transform_indices = @transform_7, window_bounds = array<i64: 16, 16>}]} {
    %c0 = arith.constant 0 : index
    %c0_0 = arith.constant 0 : index
    %0 = vector.load %arg1[%c0, %c0_0] : memref<16x32xf32, #tpu.memory_space<vmem>>, vector<16x32xf32>
    %c0_1 = arith.constant 0 : index
    %c0_2 = arith.constant 0 : index
    %1 = vector.load %arg2[%c0_1, %c0_2] : memref<32x64xf32, #tpu.memory_space<vmem>>, vector<32x64xf32>
    %cst = arith.constant dense<0.000000e+00> : vector<16x64xf32>
    %2 = tpu.matmul %0, %1, %cst {dimension_numbers = #tpu.dot_dimension_numbers<[1], [0], [0], [1], [0, 0, 1, 1], [], []>} : vector<16x32xf32>, vector<32x64xf32>, vector<16x64xf32> -> vector<16x64xf32>
    %c0_3 = arith.constant 0 : index
    %c0_4 = arith.constant 0 : index
    %3 = vector.load %arg3[%c0_3, %c0_4] : memref<1x64xf32, #tpu.memory_space<vmem>>, vector<1x64xf32>
    %4 = vector.broadcast %3 : vector<1x64xf32> to vector<16x64xf32>
    %5 = arith.addf %2, %4 : vector<16x64xf32>
    %cst_5 = arith.constant 5.000000e-01 : f32
    %6 = vector.broadcast %cst_5 : f32 to vector<16x64xf32>
    %7 = arith.mulf %6, %5 : vector<16x64xf32>
    %cst_6 = arith.constant 0.707106769 : f32
    %8 = vector.broadcast %cst_6 : f32 to vector<16x64xf32>
    %9 = arith.mulf %5, %8 : vector<16x64xf32>
    %10 = math.erf %9 : vector<16x64xf32>
    %cst_7 = arith.constant 1.000000e+00 : f32
    %11 = vector.broadcast %cst_7 : f32 to vector<16x64xf32>
    %12 = arith.addf %11, %10 : vector<16x64xf32>
    %13 = arith.mulf %7, %12 : vector<16x64xf32>
    %cst_8 = arith.constant dense<0.000000e+00> : vector<64xf32>
    %14 = vector.multi_reduction <add>, %13, %cst_8 [0] : vector<16x64xf32> to vector<64xf32>
    %15 = vector.shape_cast %14 : vector<64xf32> to vector<1x64xf32>
    %16 = arith.mulf %13, %13 : vector<16x64xf32>
    %cst_9 = arith.constant dense<0.000000e+00> : vector<64xf32>
    %17 = vector.multi_reduction <add>, %16, %cst_9 [0] : vector<16x64xf32> to vector<64xf32>
    %18 = vector.shape_cast %17 : vector<64xf32> to vector<1x64xf32>
    %cst_10 = arith.constant 6.250000e-02 : f32
    %19 = vector.broadcast %cst_10 : f32 to vector<1x64xf32>
    %20 = arith.mulf %15, %19 : vector<1x64xf32>
    %cst_11 = arith.constant 6.250000e-02 : f32
    %21 = vector.broadcast %cst_11 : f32 to vector<1x64xf32>
    %22 = arith.mulf %18, %21 : vector<1x64xf32>
    %23 = arith.mulf %20, %20 : vector<1x64xf32>
    %24 = arith.subf %22, %23 : vector<1x64xf32>
    %c0_12 = arith.constant 0 : index
    %c0_13 = arith.constant 0 : index
    %25 = vector.load %arg4[%c0_12, %c0_13] : memref<1x64xf32, #tpu.memory_space<vmem>>, vector<1x64xf32>
    %cst_14 = arith.constant 9.99999974E-6 : f32
    %26 = vector.broadcast %cst_14 : f32 to vector<1x64xf32>
    %27 = arith.addf %24, %26 : vector<1x64xf32>
    %28 = math.rsqrt %27 : vector<1x64xf32>
    %29 = arith.mulf %25, %28 : vector<1x64xf32>
    %c0_15 = arith.constant 0 : index
    %c0_16 = arith.constant 0 : index
    %30 = vector.load %arg5[%c0_15, %c0_16] : memref<1x64xf32, #tpu.memory_space<vmem>>, vector<1x64xf32>
    %31 = arith.mulf %20, %29 : vector<1x64xf32>
    %32 = arith.subf %30, %31 : vector<1x64xf32>
    %33 = vector.broadcast %29 : vector<1x64xf32> to vector<16x64xf32>
    %34 = arith.mulf %13, %33 : vector<16x64xf32>
    %35 = vector.broadcast %32 : vector<1x64xf32> to vector<16x64xf32>
    %36 = arith.addf %34, %35 : vector<16x64xf32>
    %c0_17 = arith.constant 0 : index
    %c0_18 = arith.constant 0 : index
    %37 = vector.load %arg6[%c0_17, %c0_18] : memref<64x16xf32, #tpu.memory_space<vmem>>, vector<64x16xf32>
    %cst_19 = arith.constant dense<0.000000e+00> : vector<16x16xf32>
    %38 = tpu.matmul %36, %37, %cst_19 {dimension_numbers = #tpu.dot_dimension_numbers<[1], [0], [0], [1], [0, 0, 1, 1], [], []>} : vector<16x64xf32>, vector<64x16xf32>, vector<16x16xf32> -> vector<16x16xf32>
    %c0_20 = arith.constant 0 : index
    %c0_21 = arith.constant 0 : index
    %39 = vector.load %arg7[%c0_20, %c0_21] : memref<1x16xf32, #tpu.memory_space<vmem>>, vector<1x16xf32>
    %40 = vector.broadcast %39 : vector<1x16xf32> to vector<16x16xf32>
    %41 = arith.addf %38, %40 : vector<16x16xf32>
    %c0_22 = arith.constant 0 : index
    %c0_23 = arith.constant 0 : index
    %42 = vector.load %arg8[%c0_22, %c0_23] : memref<16x16xf32, #tpu.memory_space<vmem>>, vector<16x16xf32>
    tpu.vector_store %arg8[%c0_22, %c0_23], %41 {strides = array<i32>} : memref<16x16xf32, #tpu.memory_space<vmem>>, vector<16x16xf32>,
    return
  }
  func.func @transform_0(%arg0: i32) -> (i32, i32) {
    %c0_i32 = arith.constant 0 : i32
    %c0_i32_0 = arith.constant 0 : i32
    %c0_i32_1 = arith.constant 0 : i32
    return %c0_i32, %c0_i32_0 : i32, i32
  }
  func.func @transform_1(%arg0: i32) -> (i32, i32) {
    %c0_i32 = arith.constant 0 : i32
    %c0_i32_0 = arith.constant 0 : i32
    %c0_i32_1 = arith.constant 0 : i32
    return %c0_i32, %c0_i32_0 : i32, i32
  }
  func.func @transform_2(%arg0: i32) -> (i32, i32) {
    %c0_i32 = arith.constant 0 : i32
    %c0_i32_0 = arith.constant 0 : i32
    %c0_i32_1 = arith.constant 0 : i32
    return %c0_i32, %c0_i32_0 : i32, i32
  }
  func.func @transform_3(%arg0: i32) -> (i32, i32) {
    %c0_i32 = arith.constant 0 : i32
    %c0_i32_0 = arith.constant 0 : i32
    %c0_i32_1 = arith.constant 0 : i32
    return %c0_i32, %c0_i32_0 : i32, i32
  }
  func.func @transform_4(%arg0: i32) -> (i32, i32) {
    %c0_i32 = arith.constant 0 : i32
    %c0_i32_0 = arith.constant 0 : i32
    %c0_i32_1 = arith.constant 0 : i32
    return %c0_i32, %c0_i32_0 : i32, i32
  }
  func.func @transform_5(%arg0: i32) -> (i32, i32) {
    %c0_i32 = arith.constant 0 : i32
    %c0_i32_0 = arith.constant 0 : i32
    %c0_i32_1 = arith.constant 0 : i32
    return %c0_i32, %c0_i32_0 : i32, i32
  }
  func.func @transform_6(%arg0: i32) -> (i32, i32) {
    %c0_i32 = arith.constant 0 : i32
    %c0_i32_0 = arith.constant 0 : i32
    %c0_i32_1 = arith.constant 0 : i32
    return %c0_i32, %c0_i32_0 : i32, i32
  }
  func.func @transform_7(%arg0: i32) -> (i32, i32) {
    %c0_i32 = arith.constant 0 : i32
    %c0_i32_0 = arith.constant 0 : i32
    %c0_i32_1 = arith.constant 0 : i32
    return %c0_i32, %c0_i32_0 : i32, i32
  }
}

</mosaic_0001>

<llo_original>
// kernel: tpu_custom_call.1
$region0: #{tpu_custom_call.1}
  #allocation0 [shape = 'u32[]', space=smem, size = 0x4, offset = 0x4, fixed_abs, tag = 'smem constant byte address 0x4 - core index']
  #allocation1 [shape = 'u32[144,128]{1,0:T(1,128)}', space=vmem, size = 0x12000, scoped, tag = 'internal scratch']
  %s0 = inlined_call_operand.vmem [shape: f32[16,32], index: 0, kind: input, shape index: {}]
  %s1 = inlined_call_operand.vmem [shape: f32[32,64], index: 1, kind: input, shape index: {}]
  %s2 = inlined_call_operand.vmem [shape: f32[1,64], index: 2, kind: input, shape index: {}]
  %s3 = inlined_call_operand.vmem [shape: f32[1,64], index: 3, kind: input, shape index: {}]
  %s4 = inlined_call_operand.vmem [shape: f32[1,64], index: 4, kind: input, shape index: {}]
  %s5 = inlined_call_operand.vmem [shape: f32[64,16], index: 5, kind: input, shape index: {}]
  %s6 = inlined_call_operand.vmem [shape: f32[1,16], index: 6, kind: input, shape index: {}]
  %s7 = inlined_call_operand.hbm [shape: f32[16,16], index: 7, kind: output, shape index: {}]
  %s8 = sld [smem:[#allocation0]]
  $region38: #{tpu_custom_call.1} parent=0
    _
  %s10 = ssub.s32 1, %s8
  %s11 = scalar_select 0, %s10, %s8
  $region1: #{tpu_custom_call.1} parent=0
    #allocation2 [shape = 'u8[8192]{0}', space=vmem, size = 0x2000, scoped, tag = 'output window, operand 0, single buffered']
    #allocation3 [shape = 's32[1]{0}', space=sflag, size = 0x4, scoped, tag = 'scoped memory for tpu_custom_call.1']
    %12 = vsyncpa [#allocation3], 0
    // Predicated region
    $region2: #{tpu_custom_call.1} parent=1 // pred_check
      _
    $region3: #{tpu_custom_call.1} parent=1 // pred_check_branch
      %14 = sbr.rel (0) target = $region5
    $region4: #{tpu_custom_call.1} parent=1 // pred_region
      _
    $region5: #{tpu_custom_call.1} parent=1 // pred_fallthru
      _
    // Predicated region
    $region6: #{tpu_custom_call.1} parent=1 // pred_check
      _
    $region7: #{tpu_custom_call.1} parent=1 // pred_check_branch
      %16 = sbr.rel (0) target = $region9
    $region8: #{tpu_custom_call.1} parent=1 // pred_region
      _
    $region9: #{tpu_custom_call.1} parent=1 // pred_fallthru
      _
    // Predicated region
    $region10: #{tpu_custom_call.1} parent=1 // pred_check
      _
    $region11: #{tpu_custom_call.1} parent=1 // pred_check_branch
      %18 = sbr.rel (0) target = $region13
    $region12: #{tpu_custom_call.1} parent=1 // pred_region
      _
    $region13: #{tpu_custom_call.1} parent=1 // pred_fallthru
      _
    // Predicated region
    $region14: #{tpu_custom_call.1} parent=1 // pred_check
      _
    $region15: #{tpu_custom_call.1} parent=1 // pred_check_branch
      %20 = sbr.rel (0) target = $region17
    $region16: #{tpu_custom_call.1} parent=1 // pred_region
      _
    $region17: #{tpu_custom_call.1} parent=1 // pred_fallthru
      _
    // Predicated region
    $region18: #{tpu_custom_call.1} parent=1 // pred_check
      _
    $region19: #{tpu_custom_call.1} parent=1 // pred_check_branch
      %22 = sbr.rel (0) target = $region21
    $region20: #{tpu_custom_call.1} parent=1 // pred_region
      _
    $region21: #{tpu_custom_call.1} parent=1 // pred_fallthru
      _
    // Predicated region
    $region22: #{tpu_custom_call.1} parent=1 // pred_check
      _
    $region23: #{tpu_custom_call.1} parent=1 // pred_check_branch
      %24 = sbr.rel (0) target = $region25
    $region24: #{tpu_custom_call.1} parent=1 // pred_region
      _
    $region25: #{tpu_custom_call.1} parent=1 // pred_fallthru
      _
    // Predicated region
    $region26: #{tpu_custom_call.1} parent=1 // pred_check
      _
    $region27: #{tpu_custom_call.1} parent=1 // pred_check_branch
      %26 = sbr.rel (0) target = $region29
    $region28: #{tpu_custom_call.1} parent=1 // pred_region
      _
    $region29: #{tpu_custom_call.1} parent=1 // pred_fallthru
      _
    %v27 = vld [vmem:[%s0] sm:$0xff]
    %v28 = vld [vmem:[%s0 + $0x8] sm:$0xff]
    %v29 = vld [vmem:[%s1] sm:$0xff]
    %v30 = vld [vmem:[%s1 + $0x8] sm:$0xff]
    %v31 = vld [vmem:[%s1 + $0x10] sm:$0xff]
    %v32 = vld [vmem:[%s1 + $0x18] sm:$0xff]
    %v33 = vld [vmem:[%s2] sm:$0x1]
    %v35 = vlaneseq
    %v36 = vshrl.u32 %v35, 7
    %v37 = vsub.s32 0, %v36
    %v38 = vrot.slane %v33, %v37
    %vm40 = vcmask 261120
    %v42 = vsel %vm40, %v27, 0
    %v45 = vsel %vm40, %v28, 0
    %47 = vmatprep.subr.mxu0 0.0
    %48 = vmatpush1.msra.mxu0 %v29
    %49 = vmatprep.subr.mxu0 0.0
    %50 = vmatpush1.msra.mxu0 %v30
    %51 = vmatprep.subr.mxu0 0.0
    %52 = vmatpush1.msra.mxu0 %v31
    %53 = vmatprep.subr.mxu0 0.0
    %54 = vmatpush1.msra.mxu0 %v32
    %55 = vmatprep.subr.mxu0 0.0
    %56 = vmatpush1.msra.mxu0 0.0
    %57 = vmatprep.subr.mxu0 0.0
    %58 = vmatpush1.msra.mxu0 0.0
    %59 = vmatprep.subr.mxu0 0.0
    %60 = vmatpush1.msra.mxu0 0.0
    %61 = vmatprep.subr.mxu0 0.0
    %62 = vmatpush1.msra.mxu0 0.0
    %63 = vmatprep.subr.mxu0 0.0
    %64 = vmatpush1.msra.mxu0 0.0
    %65 = vmatprep.subr.mxu0 0.0
    %66 = vmatpush1.msra.mxu0 0.0
    %67 = vmatprep.subr.mxu0 0.0
    %68 = vmatpush1.msra.mxu0 0.0
    %69 = vmatprep.subr.mxu0 0.0
    %70 = vmatpush1.msra.mxu0 0.0
    %71 = vmatprep.subr.mxu0 0.0
    %72 = vmatpush1.msra.mxu0 0.0
    %73 = vmatprep.subr.mxu0 0.0
    %74 = vmatpush1.msra.mxu0 0.0
    %75 = vmatprep.subr.mxu0 0.0
    %76 = vmatpush1.msra.mxu0 0.0
    %77 = vmatprep.subr.mxu0 0.0
    %78 = vmatpush1.msra.mxu0 0.0
    %79 = vmatprep.subr.mxu0 0.0
    %80 = vmatpush1.msra.mxu0 0.0
    %81 = vmatprep.subr.mxu0 0.0
    %82 = vmatpush1.msra.mxu0 0.0
    %83 = vmatprep.subr.mxu0 0.0
    %84 = vmatpush1.msra.mxu0 0.0
    %85 = vmatprep.subr.mxu0 0.0
    %86 = vmatpush1.msra.mxu0 0.0
    %87 = vmatprep.subr.mxu0 0.0
    %88 = vmatpush1.msra.mxu0 0.0
    %89 = vmatprep.subr.mxu0 0.0
    %90 = vmatpush1.msra.mxu0 0.0
    %91 = vmatprep.subr.mxu0 0.0
    %92 = vmatpush1.msra.mxu0 0.0
    %93 = vmatprep.subr.mxu0 0.0
    %94 = vmatpush1.msra.mxu0 0.0
    %95 = vmatprep.subr.mxu0 0.0
    %96 = vmatpush1.msra.mxu0 0.0
    %97 = vmatprep.subr.mxu0 0.0
    %98 = vmatpush1.msra.mxu0 0.0
    %99 = vmatprep.subr.mxu0 0.0
    %100 = vmatpush1.msra.mxu0 0.0
    %101 = vmatprep.subr.mxu0 0.0
    %102 = vmatpush1.msra.mxu0 0.0
    %103 = vmatprep.subr.mxu0 0.0
    %104 = vmatpush1.msra.mxu0 0.0
    %105 = vmatprep.subr.mxu0 0.0
    %106 = vmatpush1.msra.mxu0 0.0
    %107 = vmatprep.subr.mxu0 0.0
    %108 = vmatpush1.msra.mxu0 0.0
    %109 = vmatprep.subr.mxu0 0.0
    %110 = vmatpush1.msra.mxu0 0.0
    %111 = vmatprep.mubr.f32.mxu0 0.0
    %112 = vmatmul.mubr.f32.gmra.mrb[0].mxu0 %v42
    %v113 = vpop.f32.mrb[0].mxu0
    %v114 = vadd.f32 %v38, %v113
    %v115 = vpop.f32.mrb[0].mxu0
    %116 = vmatprep.mubr.f32.mxu0 0.0
    %117 = vmatmul.mubr.f32.gmra.mrb[0].mxu0 %v45
    %v118 = vpop.f32.mrb[0].mxu0
    %v119 = vadd.f32 %v38, %v118
    %v120 = vpop.f32.mrb[0].mxu0
    %121 = vdwg.mxu0
    %v122 = vmul.f32 %v114, 0.5
    %v123 = vmul.f32 %v119, 0.5
    %v124 = vmul.f32 %v114, 0.70710677
    %v125 = vmul.f32 %v119, 0.70710677
    %v126 = verf.f32.pop %v124
    %v127 = verf.f32.pop %v125
    %v128 = vadd.f32 %v126, 1.0
    %v129 = vadd.f32 %v127, 1.0
    %v130 = vmul.f32 %v122, %v128
    %v131 = vmul.f32 %v123, %v129
    %vm132 = vcmask 523264
    %v133 = vsel %vm132, %v130, 0.0
    %v134 = vsel %vm132, %v131, 0.0
    %v135 = vadd.f32 %v133, %v134
    %v136 = vrot.slane %v135, 4
    %v137 = vadd.f32 %v135, %v136
    %v138 = vrot.slane %v137, 2
    %v139 = vadd.f32 %v137, %v138
    %v140 = vrot.slane %v139, 1
    %v141 = vadd.f32 %v139, %v140
    %v142 = vmul.f32 %v130, %v130
    %v143 = vmul.f32 %v131, %v131
    %v144 = vsel %vm132, %v142, 0.0
    %v145 = vsel %vm132, %v143, 0.0
    %v146 = vadd.f32 %v144, %v145
    %v147 = vrot.slane %v146, 4
    %v148 = vadd.f32 %v146, %v147
    %v149 = vrot.slane %v148, 2
    %v150 = vadd.f32 %v148, %v149
    %v151 = vrot.slane %v150, 1
    %v152 = vadd.f32 %v150, %v151
    %v153 = vmul.f32 %v141, 0.0625
    %v154 = vmul.f32 %v152, 0.0625
    %v155 = vmul.f32 %v153, %v153
    %v156 = vsub.f32 %v154, %v155
    %v157 = vld [vmem:[%s3] sm:$0x1]
    %v158 = vadd.f32 %v156, 1e-05
    %v159 = vrsqrt.pop %v158
    %v160 = vmul.f32 %v157, %v159
    %v161 = vld [vmem:[%s4] sm:$0x1]
    %v162 = vmul.f32 %v153, %v160
    %v163 = vsub.f32 %v161, %v162
    %v165 = vlaneseq
    %v166 = vshrl.u32 %v165, 7
    %v167 = vsub.s32 0, %v166
    %v168 = vrot.slane %v160, %v167
    %v170 = vmul.f32 %v130, %v168
    %v171 = vmul.f32 %v131, %v168
    %v173 = vlaneseq
    %v174 = vshrl.u32 %v173, 7
    %v175 = vsub.s32 0, %v174
    %v176 = vrot.slane %v163, %v175
    %v178 = vadd.f32 %v170, %v176
    %v179 = vadd.f32 %v171, %v176
    %v180 = vld [vmem:[%s5] sm:$0xff]
    %v181 = vld [vmem:[%s5 + $0x8] sm:$0xff]
    %v182 = vld [vmem:[%s5 + $0x10] sm:$0xff]
    %v183 = vld [vmem:[%s5 + $0x18] sm:$0xff]
    %v184 = vld [vmem:[%s5 + $0x20] sm:$0xff]
    %v185 = vld [vmem:[%s5 + $0x28] sm:$0xff]
    %v186 = vld [vmem:[%s5 + $0x30] sm:$0xff]
    %v187 = vld [vmem:[%s5 + $0x38] sm:$0xff]
    %v188 = vld [vmem:[%s6] sm:$0x1]
    %v190 = vlaneseq
    %v191 = vshrl.u32 %v190, 7
    %v192 = vsub.s32 0, %v191
    %v193 = vrot.slane %v188, %v192
    %v196 = vsel %vm132, %v178, 0
    %v199 = vsel %vm132, %v179, 0
    %201 = vmatprep.subr.mxu0 0.0
    %202 = vmatpush1.msra.mxu0 %v180
    %203 = vmatprep.subr.mxu0 0.0
    %204 = vmatpush1.msra.mxu0 %v181
    %205 = vmatprep.subr.mxu0 0.0
    %206 = vmatpush1.msra.mxu0 %v182
    %207 = vmatprep.subr.mxu0 0.0
    %208 = vmatpush1.msra.mxu0 %v183
    %209 = vmatprep.subr.mxu0 0.0
    %210 = vmatpush1.msra.mxu0 %v184
    %211 = vmatprep.subr.mxu0 0.0
    %212 = vmatpush1.msra.mxu0 %v185
    %213 = vmatprep.subr.mxu0 0.0
    %214 = vmatpush1.msra.mxu0 %v186
    %215 = vmatprep.subr.mxu0 0.0
    %216 = vmatpush1.msra.mxu0 %v187
    %217 = vmatprep.subr.mxu0 0.0
    %218 = vmatpush1.msra.mxu0 0.0
    %219 = vmatprep.subr.mxu0 0.0
    %220 = vmatpush1.msra.mxu0 0.0
    %221 = vmatprep.subr.mxu0 0.0
    %222 = vmatpush1.msra.mxu0 0.0
    %223 = vmatprep.subr.mxu0 0.0
    %224 = vmatpush1.msra.mxu0 0.0
    %225 = vmatprep.subr.mxu0 0.0
    %226 = vmatpush1.msra.mxu0 0.0
    %227 = vmatprep.subr.mxu0 0.0
    %228 = vmatpush1.msra.mxu0 0.0
    %229 = vmatprep.subr.mxu0 0.0
    %230 = vmatpush1.msra.mxu0 0.0
    %231 = vmatprep.subr.mxu0 0.0
    %232 = vmatpush1.msra.mxu0 0.0
    %233 = vmatprep.subr.mxu0 0.0
    %234 = vmatpush1.msra.mxu0 0.0
    %235 = vmatprep.subr.mxu0 0.0
    %236 = vmatpush1.msra.mxu0 0.0
    %237 = vmatprep.subr.mxu0 0.0
    %238 = vmatpush1.msra.mxu0 0.0
    %239 = vmatprep.subr.mxu0 0.0
    %240 = vmatpush1.msra.mxu0 0.0
    %241 = vmatprep.subr.mxu0 0.0
    %242 = vmatpush1.msra.mxu0 0.0
    %243 = vmatprep.subr.mxu0 0.0
    %244 = vmatpush1.msra.mxu0 0.0
    %245 = vmatprep.subr.mxu0 0.0
    %246 = vmatpush1.msra.mxu0 0.0
    %247 = vmatprep.subr.mxu0 0.0
    %248 = vmatpush1.msra.mxu0 0.0
    %249 = vmatprep.subr.mxu0 0.0
    %250 = vmatpush1.msra.mxu0 0.0
    %251 = vmatprep.subr.mxu0 0.0
    %252 = vmatpush1.msra.mxu0 0.0
    %253 = vmatprep.subr.mxu0 0.0
    %254 = vmatpush1.msra.mxu0 0.0
    %255 = vmatprep.subr.mxu0 0.0
    %256 = vmatpush1.msra.mxu0 0.0
    %257 = vmatprep.subr.mxu0 0.0
    %258 = vmatpush1.msra.mxu0 0.0
    %259 = vmatprep.subr.mxu0 0.0
    %260 = vmatpush1.msra.mxu0 0.0
    %261 = vmatprep.subr.mxu0 0.0
    %262 = vmatpush1.msra.mxu0 0.0
    %263 = vmatprep.subr.mxu0 0.0
    %264 = vmatpush1.msra.mxu0 0.0
    %265 = vmatprep.mubr.f32.mxu0 0.0
    %266 = vmatmul.mubr.f32.gmra.mrb[0].mxu0 %v196
    %v267 = vpop.f32.mrb[0].mxu0
    %v268 = vadd.f32 %v193, %v267
    %v269 = vpop.f32.mrb[0].mxu0
    %270 = vmatprep.mubr.f32.mxu0 0.0
    %271 = vmatmul.mubr.f32.gmra.mrb[0].mxu0 %v199
    %v272 = vpop.f32.mrb[0].mxu0
    %v273 = vadd.f32 %v193, %v272
    %v274 = vpop.f32.mrb[0].mxu0
    %275 = vdwg.mxu0
    %vm276 = vcmask 130048
    %277 = vst.msk [vmem:[#allocation2] sm:$0xff] %vm276, %v268
    %278 = vst.msk [vmem:[#allocation2 + $0x8] sm:$0xff] %vm276, %v273
    // Predicated region
    $region30: #{tpu_custom_call.1} parent=1 // pred_check
      _
    $region31: #{tpu_custom_call.1} parent=1 // pred_check_branch
      %280 = sbr.rel (0) target = $region33
    $region32: #{tpu_custom_call.1} parent=1 // pred_region
      %s282 = ssub.s32 256, 256
      %283 = vsyncadd [#allocation3], %s282
      %s284 = sshll.u32 [#allocation2], 4
      %s285 = int_to_ptr.vmem [resolvable:$true] %s284
      %290 = dma.vmem_to_hbm [thread:$0]  %s285, 256, %s7, [#allocation3], 128, 128, 8
    $region33: #{tpu_custom_call.1} parent=1 // pred_fallthru
      _
    // Predicated region
    $region34: #{tpu_custom_call.1} parent=1 // pred_check
      _
    $region35: #{tpu_custom_call.1} parent=1 // pred_check_branch
      %292 = sbr.rel (0) target = $region37
    $region36: #{tpu_custom_call.1} parent=1 // pred_region
      %293 = dma.done [#allocation3], 256
    $region37: #{tpu_custom_call.1} parent=1 // pred_fallthru
      _
    %294 = vsyncpa [#allocation3], 1

</llo_original>
